<compile_context>
chip_gen: v5e
topology: v5e:2x2
jax: 0.10.0
libtpu: 0.0.40
codegen_flags: <defaults>
</compile_context>

<pallas_src>
import jax
import jax.numpy as jnp
from jax import lax
from jax.experimental import pallas as pl
from jax.experimental.pallas import tpu as pltpu

LANE = 128
# Inputs up to this many 128-lane rows (0.25 MiB f32/input) take the
# single-grid-step latency-floor path; larger inputs get the pipelined path.
SINGLE_STEP_MAX_ROWS = 512
# Leading "parallel" grid axis size: lets v7x's two TensorCores each stream
# half the input; harmless (sequential) on single-core chips.
NUM_CORE_SPLITS = 2


def _default_block_rows(dtype) -> int:
    """Generation- and dtype-tuned row-tile size (multiple of 8/16/32)."""
    try:
        kind = jax.devices()[0].device_kind.lower()
    except Exception:  # pragma: no cover - defensive
        kind = ""
    # v6e / v7x: 32 MiB scoped-VMEM default -> 4 MiB/input blocks.
    # v5e / older: 16 MiB scoped default -> 2 MiB/input blocks.
    base = 8192 if ("v6" in kind or "v7" in kind or "7x" in kind) else 4096
    itemsize = jnp.dtype(dtype).itemsize
    if itemsize < 4:
        base *= 4 // itemsize  # keep bytes-per-step constant for bf16/int8
    return base


def _single_step_kernel(pred_ref, label_ref, o_ref):
    """Whole (small) slab in one step: load -> log -> square -> sum."""
    p = pred_ref[...].astype(jnp.float32)
    l = label_ref[...].astype(jnp.float32)
    d = jnp.log(p + 1.0) - jnp.log(l + 1.0)
    o_ref[0, 0] = jnp.sum(d * d)


def _make_tiled_kernel(rows: int, block_rows: int, kt: int, any_ragged: bool):
    """Streaming reduction over (block_rows, 128) tiles into an (8,128) acc."""
    groups = block_rows // 8

    def kernel(pred_ref, label_ref, o_ref, acc_ref):
        c = pl.program_id(0)  # core-split index ("parallel")
        k = pl.program_id(1)  # reduction step within this split ("arbitrary")

        @pl.when(k == 0)
        def _():
            acc_ref[...] = jnp.zeros_like(acc_ref)

        p = pred_ref[...].astype(jnp.float32)
        l = label_ref[...].astype(jnp.float32)
        d = jnp.log(p + 1.0) - jnp.log(l + 1.0)
        sq = d * d

        if any_ragged:
            block_start = (c * kt + k) * block_rows
            needs_mask = block_start + block_rows > rows

            @pl.when(jnp.logical_not(needs_mask))
            def _():
                # Mask-free fast path for interior blocks: layout-preserving
                # reshape + leading-axis (vreg-wise) sum, pure VPU work.
                acc_ref[...] += jnp.sum(sq.reshape(groups, 8, LANE), axis=0)

            @pl.when(needs_mask)
            def _():
                # Edge (or clamped duplicate) block: zero out rows past the
                # logical end before accumulating.  OOB reads may be garbage
                # (even NaN); the select discards them.
                row = lax.broadcasted_iota(jnp.int32, sq.shape, 0) + block_start
                masked = jnp.where(row < rows, sq, 0.0)
                acc_ref[...] += jnp.sum(masked.reshape(groups, 8, LANE), axis=0)
        else:
            acc_ref[...] += jnp.sum(sq.reshape(groups, 8, LANE), axis=0)

        @pl.when(k == kt - 1)
        def _():
            o_ref[0] = acc_ref[...]

    return kernel


def rmsle_loss(pred: jax.Array, label: jax.Array, *,
               block_rows: int | None = None) -> jax.Array:
    """Pallas RMSLE loss: sqrt(mean((log(pred+1) - log(label+1))**2))."""
    assert pred.shape == label.shape
    total_n = pred.size

    flat_p = pred.reshape(-1)
    flat_l = label.reshape(-1)

    rows = total_n // LANE
    main_n = rows * LANE

    # <128-element lane tail: tiny jnp expression in the wrapper instead of a
    # full-array jnp.pad (which would copy both inputs through HBM).
    if main_n != total_n:
        tp = flat_p[main_n:].astype(jnp.float32)
        tl = flat_l[main_n:].astype(jnp.float32)
        td = jnp.log(tp + 1.0) - jnp.log(tl + 1.0)
        tail_sq = jnp.sum(td * td)
    else:
        tail_sq = jnp.float32(0.0)

    if rows == 0:
        return jnp.sqrt(tail_sq / jnp.float32(total_n))

    if main_n != total_n:
        # Contiguous prefix slice (no relayout); only needed for ragged sizes.
        flat_p = flat_p[:main_n]
        flat_l = flat_l[:main_n]
    p2d = flat_p.reshape(rows, LANE)
    l2d = flat_l.reshape(rows, LANE)

    if block_rows is None:
        block_rows = _default_block_rows(pred.dtype)

    if rows <= SINGLE_STEP_MAX_ROWS:
        # Small input: one full-extent block, straight-line body.
        sq_sum = pl.pallas_call(
            _single_step_kernel,
            out_shape=jax.ShapeDtypeStruct((1, 1), jnp.float32),
            grid_spec=pltpu.PrefetchScalarGridSpec(
                num_scalar_prefetch=0,
                grid=(1,),
                in_specs=[
                    pl.BlockSpec((rows, LANE), lambda i: (0, 0)),
                    pl.BlockSpec((rows, LANE), lambda i: (0, 0)),
                ],
                out_specs=pl.BlockSpec(memory_space=pltpu.SMEM),
            ),
            compiler_params=pltpu.CompilerParams(
                dimension_semantics=("arbitrary",),
            ),
        )(p2d, l2d)[0, 0]
    else:
        num_blocks = pl.cdiv(rows, block_rows)
        num_splits = NUM_CORE_SPLITS if num_blocks >= NUM_CORE_SPLITS else 1
        kt = pl.cdiv(num_blocks, num_splits)
        # Does any (c, k) step touch rows past the end of the array?
        any_ragged = (num_splits * kt * block_rows) > rows
        needs_clamp = (num_splits * kt) > num_blocks

        if needs_clamp:
            # Keep every DMA in bounds; duplicated (clamped) blocks are fully
            # masked in-kernel so they contribute zero.
            def in_map(c, k):
                return (jnp.minimum(c * kt + k, num_blocks - 1), 0)
        else:
            def in_map(c, k):
                return (c * kt + k, 0)

        partials = pl.pallas_call(
            _make_tiled_kernel(rows, block_rows, kt, any_ragged),
            out_shape=jax.ShapeDtypeStruct((num_splits, 8, LANE), jnp.float32),
            grid_spec=pltpu.PrefetchScalarGridSpec(
                num_scalar_prefetch=0,
                grid=(num_splits, kt),
                in_specs=[
                    pl.BlockSpec((block_rows, LANE), in_map),
                    pl.BlockSpec((block_rows, LANE), in_map),
                ],
                out_specs=pl.BlockSpec((1, 8, LANE), lambda c, k: (c, 0, 0)),
                scratch_shapes=[pltpu.VMEM((8, LANE), jnp.float32)],
            ),
            compiler_params=pltpu.CompilerParams(
                # c axis sharded across TensorCores on v7x; k axis is the
                # carried reduction.
                dimension_semantics=("parallel", "arbitrary"),
            ),
        )(p2d, l2d)
        sq_sum = jnp.sum(partials)

    return jnp.sqrt((sq_sum + tail_sq) / jnp.float32(total_n))


if __name__ == "__main__":
    key = jax.random.PRNGKey(0)
    k1, k2 = jax.random.split(key)

    # NCHW call-site shape from the original model; strictly positive values
    # so the log is well defined (typical RMSLE usage).
    pred = jax.random.uniform(k1, (2, 4, 16, 16), dtype=jnp.float32,
                              minval=0.0, maxval=10.0)
    label = jax.random.uniform(k2, (2, 4, 16, 16), dtype=jnp.float32,
                               minval=0.0, maxval=10.0)
    loss = jax.block_until_ready(rmsle_loss(pred, label))
    ref = jnp.sqrt(jnp.mean((jnp.log(pred + 1.0) - jnp.log(label + 1.0)) ** 2))
    assert jnp.allclose(loss, ref, rtol=1e-5, atol=1e-6), (loss, ref)

    # Exercise the tiled two-split path with a forced small tile: ragged last
    # block, <128-element lane tail, and an odd block count (clamped duplicate
    # block on the second split) are all covered while keeping the test small.
    big_shape = (7, 97, 113)  # 76727 elems -> 599 rows + 71-element tail
    bp = jax.random.uniform(k1, big_shape, dtype=jnp.float32,
                            minval=0.0, maxval=10.0)
    bl = jax.random.uniform(k2, big_shape, dtype=jnp.float32,
                            minval=0.0, maxval=10.0)
    big_loss = jax.block_until_ready(rmsle_loss(bp, bl, block_rows=256))
    big_ref = jnp.sqrt(jnp.mean((jnp.log(bp + 1.0) - jnp.log(bl + 1.0)) ** 2))
    assert jnp.allclose(big_loss, big_ref, rtol=1e-5, atol=1e-6), (big_loss, big_ref)

    # Also cover the default-tile tiled path with an aligned (mask-free) size.
    med_shape = (8, 16, 64, 16)  # 131072 elems -> 1024 rows, no tail
    mp = jax.random.uniform(k1, med_shape, dtype=jnp.float32,
                            minval=0.0, maxval=10.0)
    ml = jax.random.uniform(k2, med_shape, dtype=jnp.float32,
                            minval=0.0, maxval=10.0)
    med_loss = jax.block_until_ready(rmsle_loss(mp, ml, block_rows=512))
    med_ref = jnp.sqrt(jnp.mean((jnp.log(mp + 1.0) - jnp.log(ml + 1.0)) ** 2))
    assert jnp.allclose(med_loss, med_ref, rtol=1e-5, atol=1e-6), (med_loss, med_ref)

    print("KERNEL_OK")
</pallas_src>

<mosaic_0001>
module attributes {stable_mosaic.version = 11 : i64} {
  func.func @_single_step_kernel(%arg0: i32, %arg1: memref<16x128xf32, #tpu.memory_space<vmem>>, %arg2: memref<16x128xf32, #tpu.memory_space<vmem>>, %arg3: memref<1x1xf32, #tpu.memory_space<smem>>) attributes {dimension_semantics = [#tpu.dimension_semantics<arbitrary>], iteration_bounds = array<i64: 1>, scalar_prefetch = 0 : i64, scratch_operands = 0 : i64, tpu.core_type = #tpu.core_type<tc>, window_params = [{pipeline_mode = #tpu.pipeline_mode<synchronous>, transform_indices = @transform_0, window_bounds = array<i64: 16, 128>}, {pipeline_mode = #tpu.pipeline_mode<synchronous>, transform_indices = @transform_1, window_bounds = array<i64: 16, 128>}, {transform_indices = @transform_2, window_bounds = array<i64: 1, 1>}]} {
    %c0 = arith.constant 0 : index
    %c0_0 = arith.constant 0 : index
    %0 = vector.load %arg1[%c0, %c0_0] : memref<16x128xf32, #tpu.memory_space<vmem>>, vector<16x128xf32>
    %c0_1 = arith.constant 0 : index
    %c0_2 = arith.constant 0 : index
    %1 = vector.load %arg2[%c0_1, %c0_2] : memref<16x128xf32, #tpu.memory_space<vmem>>, vector<16x128xf32>
    %cst = arith.constant 1.000000e+00 : f32
    %2 = vector.broadcast %cst : f32 to vector<16x128xf32>
    %3 = arith.addf %0, %2 : vector<16x128xf32>
    %4 = math.log %3 : vector<16x128xf32>
    %cst_3 = arith.constant 1.000000e+00 : f32
    %5 = vector.broadcast %cst_3 : f32 to vector<16x128xf32>
    %6 = arith.addf %1, %5 : vector<16x128xf32>
    %7 = math.log %6 : vector<16x128xf32>
    %8 = arith.subf %4, %7 : vector<16x128xf32>
    %9 = arith.mulf %8, %8 : vector<16x128xf32>
    %10 = vector.shape_cast %9 : vector<16x128xf32> to vector<1x16x128xf32>
    %cst_4 = arith.constant dense<0.000000e+00> : vector<1xf32>
    %11 = vector.multi_reduction <add>, %10, %cst_4 [1, 2] : vector<1x16x128xf32> to vector<1xf32>
    %12 = vector.shape_cast %11 : vector<1xf32> to vector<1x1x1xf32>
    %13 = vector.extract %12[0, 0, 0] : f32 from vector<1x1x1xf32>
    %c0_5 = arith.constant 0 : index
    %c0_6 = arith.constant 0 : index
    %14 = memref.load %arg3[%c0_5, %c0_6] : memref<1x1xf32, #tpu.memory_space<smem>>
    memref.store %13, %arg3[%c0_5, %c0_6] : memref<1x1xf32, #tpu.memory_space<smem>>
    return
  }
  func.func @transform_0(%arg0: i32) -> (i32, i32) {
    %c0_i32 = arith.constant 0 : i32
    %c0_i32_0 = arith.constant 0 : i32
    %c0_i32_1 = arith.constant 0 : i32
    return %c0_i32, %c0_i32_0 : i32, i32
  }
  func.func @transform_1(%arg0: i32) -> (i32, i32) {
    %c0_i32 = arith.constant 0 : i32
    %c0_i32_0 = arith.constant 0 : i32
    %c0_i32_1 = arith.constant 0 : i32
    return %c0_i32, %c0_i32_0 : i32, i32
  }
  func.func @transform_2(%arg0: i32) -> (i32, i32) {
    %c0_i32 = arith.constant 0 : i32
    %c0_i32_0 = arith.constant 0 : i32
    %c0_i32_1 = arith.constant 0 : i32
    return %c0_i32, %c0_i32_0 : i32, i32
  }
}

</mosaic_0001>

<llo_original>
// kernel: tpu_custom_call.1
$region0: #{tpu_custom_call.1}
  #allocation0 [shape = 'u32[]', space=smem, size = 0x4, offset = 0x4, fixed_abs, tag = 'smem constant byte address 0x4 - core index']
  #allocation1 [shape = 'u32[72,128]{1,0:T(1,128)}', space=vmem, size = 0x9000, scoped, tag = 'internal scratch']
  %s0 = inlined_call_operand.hbm [shape: f32[16,128], index: 0, kind: input, shape index: {}]
  %s1 = inlined_call_operand.hbm [shape: f32[16,128], index: 1, kind: input, shape index: {}]
  %s2 = inlined_call_operand.hbm [shape: f32[1,1], index: 2, kind: output, shape index: {}]
  %s3 = sld [smem:[#allocation0]]
  $region26: #{tpu_custom_call.1} parent=0
    _
  %s5 = ssub.s32 1, %s3
  %s6 = scalar_select 0, %s5, %s3
  $region1: #{tpu_custom_call.1} parent=0
    #allocation2 [shape = 'u8[8192]{0}', space=vmem, size = 0x2000, scoped, tag = 'input window, operand 0, single buffered']
    #allocation3 [shape = 's32[1]{0}', space=sflag, size = 0x4, scoped, tag = 'scoped memory for tpu_custom_call.1']
    #allocation4 [shape = 's32[1]{0}', space=sflag, size = 0x4, scoped, tag = 'scoped memory for tpu_custom_call.1']
    #allocation5 [shape = 'u8[8192]{0}', space=vmem, size = 0x2000, scoped, tag = 'input window, operand 1, single buffered']
    #allocation6 [shape = 's32[1]{0}', space=sflag, size = 0x4, scoped, tag = 'scoped memory for tpu_custom_call.1']
    #allocation7 [shape = 'u8[512]{0}', space=smem, size = 0x200, scoped, tag = 'output window, operand 0, single buffered']
    %7 = vsyncpa [#allocation3], 0
    %8 = vsyncpa [#allocation6], 0
    %9 = vsyncpa [#allocation4], 0
    // Predicated region
    $region2: #{tpu_custom_call.1} parent=1 // pred_check
      _
    $region3: #{tpu_custom_call.1} parent=1 // pred_check_branch
      %11 = sbr.rel (0) target = $region5
    $region4: #{tpu_custom_call.1} parent=1 // pred_region
      %13 = vsyncadd [#allocation3], 0
      %s14 = sshll.u32 %s0, 4
      %s15 = int_to_ptr.hbm [resolvable:$true] %s14
      %s16 = sshll.u32 [#allocation2], 4
      %s17 = int_to_ptr.vmem [resolvable:$true] %s16
      %22 = dma.hbm_to_vmem [thread:$0]  %s15, 256, %s17, [#allocation3], 128, 128, 8
    $region5: #{tpu_custom_call.1} parent=1 // pred_fallthru
      _
    // Predicated region
    $region6: #{tpu_custom_call.1} parent=1 // pred_check
      _
    $region7: #{tpu_custom_call.1} parent=1 // pred_check_branch
      %24 = sbr.rel (0) target = $region9
    $region8: #{tpu_custom_call.1} parent=1 // pred_region
      %26 = vsyncadd [#allocation6], 0
      %s27 = sshll.u32 %s1, 4
      %s28 = int_to_ptr.hbm [resolvable:$true] %s27
      %s29 = sshll.u32 [#allocation5], 4
      %s30 = int_to_ptr.vmem [resolvable:$true] %s29
      %35 = dma.hbm_to_vmem [thread:$0]  %s28, 256, %s30, [#allocation6], 128, 128, 8
    $region9: #{tpu_custom_call.1} parent=1 // pred_fallthru
      _
    // Predicated region
    $region10: #{tpu_custom_call.1} parent=1 // pred_check
      _
    $region11: #{tpu_custom_call.1} parent=1 // pred_check_branch
      %37 = sbr.rel (0) target = $region13
    $region12: #{tpu_custom_call.1} parent=1 // pred_region
      %39 = dma.done [#allocation3], 256
    $region13: #{tpu_custom_call.1} parent=1 // pred_fallthru
      _
    // Predicated region
    $region14: #{tpu_custom_call.1} parent=1 // pred_check
      _
    $region15: #{tpu_custom_call.1} parent=1 // pred_check_branch
      %41 = sbr.rel (0) target = $region17
    $region16: #{tpu_custom_call.1} parent=1 // pred_region
      %43 = dma.done [#allocation6], 256
    $region17: #{tpu_custom_call.1} parent=1 // pred_fallthru
      _
    %v44 = vld [vmem:[#allocation2] sm:$0xff]
    %v45 = vld [vmem:[#allocation2 + $0x8] sm:$0xff]
    %v46 = vld [vmem:[#allocation5] sm:$0xff]
    %v47 = vld [vmem:[#allocation5 + $0x8] sm:$0xff]
    %v48 = vadd.f32 %v44, 1.0
    %v49 = vadd.f32 %v45, 1.0
    %v50 = vlog2.pop %v48
    %v51 = vmul.f32 %v50, 0.6931472
    %v52 = vlog2.pop %v49
    %v53 = vmul.f32 %v52, 0.6931472
    %v54 = vadd.f32 %v46, 1.0
    %v55 = vadd.f32 %v47, 1.0
    %v56 = vlog2.pop %v54
    %v57 = vmul.f32 %v56, 0.6931472
    %v58 = vlog2.pop %v55
    %v59 = vmul.f32 %v58, 0.6931472
    %v60 = vsub.f32 %v51, %v57
    %v61 = vsub.f32 %v53, %v59
    %v62 = vmul.f32 %v60, %v60
    %v63 = vmul.f32 %v61, %v61
    %v64 = vadd.f32 %v62, %v63
    %65 = vadd.xlane.f32.xlu0 %v64
    %v66 = vpop.xlane.xlu0 %65
    %v67 = vrot.slane %v66, 4
    %v68 = vadd.f32 %v66, %v67
    %v69 = vrot.slane %v68, 2
    %v70 = vadd.f32 %v68, %v69
    %v71 = vrot.slane %v70, 1
    %v72 = vadd.f32 %v70, %v71
    %s73 = vtos %v72
    %s74 = scalar_lea.smem [#allocation7], 0
    %75 = sst [smem:[%s74]] %s73
    // Predicated region
    $region18: #{tpu_custom_call.1} parent=1 // pred_check
      _
    $region19: #{tpu_custom_call.1} parent=1 // pred_check_branch
      %77 = sbr.rel (0) target = $region21
    $region20: #{tpu_custom_call.1} parent=1 // pred_region
      %79 = vsyncadd [#allocation4], 0
      %s81 = sshll.u32 %s2, 4
      %s82 = int_to_ptr.hbm [resolvable:$true] %s81
      %84 = dma.smem_to_hbm [#allocation7], 16, %s82, [#allocation4]
    $region21: #{tpu_custom_call.1} parent=1 // pred_fallthru
      _
    // Predicated region
    $region22: #{tpu_custom_call.1} parent=1 // pred_check
      _
    $region23: #{tpu_custom_call.1} parent=1 // pred_check_branch
      %86 = sbr.rel (0) target = $region25
    $region24: #{tpu_custom_call.1} parent=1 // pred_region
      %88 = dma.done [#allocation4], 16
    $region25: #{tpu_custom_call.1} parent=1 // pred_fallthru
      _
    %89 = sfence
    %90 = vsyncpa [#allocation3], 1
    %91 = vsyncpa [#allocation6], 1
    %92 = vsyncpa [#allocation4], 1

</llo_original>
